<compile_context>
chip_gen: v5e
topology: v5e:2x2
jax: 0.10.0
libtpu: 0.0.40
codegen_flags: <defaults>
</compile_context>

<pallas_src>
import jax
import jax.numpy as jnp
from jax.experimental import pallas as pl
from jax.experimental.pallas import tpu as pltpu


def _chomp_copy_kernel(x_ref, o_ref):
    # Fast path: x_ref and o_ref blocks have identical shapes -> the static
    # slice below is a no-op and this is a pure VMEM copy.
    # Fallback path (tiny L_out): x_ref block is wider along the last axis and
    # the static slice drops the chomped tail.
    o_ref[...] = x_ref[:, : o_ref.shape[-1]]


def _round_up(a: int, b: int) -> int:
    return -(-a // b) * b


def _sublane_pack(dtype) -> int:
    itemsize = jnp.dtype(dtype).itemsize
    return {1: 32, 2: 16, 4: 8}.get(itemsize, 8)


def chomp1d(x: jax.Array, chomp_size: int, *, row_tile: int = 256,
            lane_tile: int = 512) -> jax.Array:
    """Pallas equivalent of x[:, :, :-chomp_size].contiguous() for x (N, C, L)."""
    assert chomp_size > 0, "chomp_size must be positive"
    assert lane_tile % 128 == 0
    n, c, l = x.shape
    l_out = l - chomp_size
    assert l_out > 0, "chomp_size must be smaller than the sequence length"

    rows = n * c
    x2 = x.reshape(rows, l)  # free, contiguous reshape

    # ---- row (sublane) tiling: full dim, or a multiple of the dtype packing.
    pack = _sublane_pack(x.dtype)
    if rows <= row_tile:
        tr = rows  # full dim -> always a legal block dim
    else:
        tr = max(pack, (row_tile // pack) * pack)
    grid_r = pl.cdiv(rows, tr)

    # ---- lane tiling.
    if l_out >= 128:
        # Fast path: 128-multiple lane tiles covering only the first L_out
        # columns of the input; a ragged last tile (if any) is handled by
        # Pallas' standard edge-block padding / masked stores.
        tl = min(lane_tile, _round_up(l_out, 128))
        grid_l = pl.cdiv(l_out, tl)
        in_block = (tr, tl)
        out_block = (tr, tl)
    else:
        # Tiny-L_out fallback: full last-dim blocks (always legal), chomp via
        # the static slice in the kernel body.
        grid_l = 1
        in_block = (tr, l)
        out_block = (tr, l_out)

    out2 = pl.pallas_call(
        _chomp_copy_kernel,
        out_shape=jax.ShapeDtypeStruct((rows, l_out), x.dtype),
        grid_spec=pltpu.PrefetchScalarGridSpec(
            num_scalar_prefetch=0,
            grid=(grid_r, grid_l),
            in_specs=[pl.BlockSpec(in_block, lambda r, li: (r, li))],
            out_specs=pl.BlockSpec(out_block, lambda r, li: (r, li)),
        ),
        compiler_params=pltpu.CompilerParams(
            dimension_semantics=("parallel", "parallel"),
        ),
    )(x2)

    return out2.reshape(n, c, l_out)


if __name__ == "__main__":
    key = jax.random.PRNGKey(0)

    # Small shape consistent with the PyTorch module's forward (N, C, L).
    batch, channels, length = 2, 4, 16
    chomp_size = 3  # (kernel_size - 1) * dilation in a TCN block
    x = jax.random.normal(key, (batch, channels, length), dtype=jnp.float32)

    out = jax.block_until_ready(chomp1d(x, chomp_size))
    ref = x[:, :, :-chomp_size]
    assert out.shape == (batch, channels, length - chomp_size)
    assert out.dtype == x.dtype
    assert bool(jnp.array_equal(out, ref))

    # Exercise the lane-tiled fast path: aligned L_out, two 512-lane tiles.
    x2 = jax.random.normal(key, (2, 8, 1040), dtype=jnp.float32)
    out2 = jax.block_until_ready(chomp1d(x2, 16))  # L_out = 1024
    assert bool(jnp.array_equal(out2, x2[:, :, :-16]))

    # Exercise the fast path with a ragged (masked) last lane tile + bf16.
    x3 = jax.random.normal(key, (2, 8, 1037), dtype=jnp.bfloat16)
    out3 = jax.block_until_ready(chomp1d(x3, 16))  # L_out = 1021
    assert bool(jnp.array_equal(out3, x3[:, :, :-16]))

    print("KERNEL_OK")
</pallas_src>

<mosaic_0001>
module attributes {stable_mosaic.version = 11 : i64} {
  func.func @_chomp_copy_kernel(%arg0: i32, %arg1: i32, %arg2: memref<8x16xf32, #tpu.memory_space<vmem>>, %arg3: memref<8x13xf32, #tpu.memory_space<vmem>>) attributes {dimension_semantics = [#tpu.dimension_semantics<parallel>, #tpu.dimension_semantics<parallel>], iteration_bounds = array<i64: 1, 1>, scalar_prefetch = 0 : i64, scratch_operands = 0 : i64, tpu.core_type = #tpu.core_type<tc>, window_params = [{transform_indices = @transform_0, window_bounds = array<i64: 8, 16>}, {transform_indices = @transform_1, window_bounds = array<i64: 8, 13>}]} {
    %c0 = arith.constant 0 : index
    %c0_0 = arith.constant 0 : index
    %0 = vector.load %arg2[%c0, %c0_0] : memref<8x16xf32, #tpu.memory_space<vmem>>, vector<8x13xf32>
    %c0_1 = arith.constant 0 : index
    %c0_2 = arith.constant 0 : index
    %1 = vector.load %arg3[%c0_1, %c0_2] : memref<8x13xf32, #tpu.memory_space<vmem>>, vector<8x13xf32>
    tpu.vector_store %arg3[%c0_1, %c0_2], %0 {strides = array<i32>} : memref<8x13xf32, #tpu.memory_space<vmem>>, vector<8x13xf32>,
    return
  }
  func.func @transform_0(%arg0: i32, %arg1: i32) -> (i32, i32) {
    %c0_i32 = arith.constant 0 : i32
    return %arg0, %arg1 : i32, i32
  }
  func.func @transform_1(%arg0: i32, %arg1: i32) -> (i32, i32) {
    %c0_i32 = arith.constant 0 : i32
    return %arg0, %arg1 : i32, i32
  }
}

</mosaic_0001>

<llo_original>
// kernel: tpu_custom_call.1
$region0: #{tpu_custom_call.1}
  #allocation0 [shape = 'u32[]', space=smem, size = 0x4, offset = 0x4, fixed_abs, tag = 'smem constant byte address 0x4 - core index']
  #allocation1 [shape = 'u32[72,128]{1,0:T(1,128)}', space=vmem, size = 0x9000, scoped, tag = 'internal scratch']
  %s0 = inlined_call_operand.hbm [shape: f32[8,16], index: 0, kind: input, shape index: {}]
  %s1 = inlined_call_operand.hbm [shape: f32[8,13], index: 1, kind: output, shape index: {}]
  %s2 = sld [smem:[#allocation0]]
  $region18: #{tpu_custom_call.1} parent=0
    _
  %s4 = ssub.s32 1, %s2
  %s5 = scalar_select 0, %s4, %s2
  $region1: #{tpu_custom_call.1} parent=0
    #allocation2 [shape = 'u8[4096]{0}', space=vmem, size = 0x1000, scoped, tag = 'input window, operand 0, single buffered']
    #allocation3 [shape = 's32[1]{0}', space=sflag, size = 0x4, scoped, tag = 'scoped memory for tpu_custom_call.1']
    #allocation4 [shape = 's32[1]{0}', space=sflag, size = 0x4, scoped, tag = 'scoped memory for tpu_custom_call.1']
    #allocation5 [shape = 'u8[4096]{0}', space=vmem, size = 0x1000, scoped, tag = 'output window, operand 0, single buffered']
    %6 = vsyncpa [#allocation3], 0
    %7 = vsyncpa [#allocation4], 0
    // Predicated region
    $region2: #{tpu_custom_call.1} parent=1 // pred_check
      _
    $region3: #{tpu_custom_call.1} parent=1 // pred_check_branch
      %9 = sbr.rel (0) target = $region5
    $region4: #{tpu_custom_call.1} parent=1 // pred_region
      %11 = vsyncadd [#allocation3], 0
      %s13 = sshll.u32 %s0, 4
      %s14 = int_to_ptr.hbm [resolvable:$true] %s13
      %s15 = sshll.u32 [#allocation2], 4
      %s16 = int_to_ptr.vmem [resolvable:$true] %s15
      %18 = dma.hbm_to_vmem [thread:$0]  %s14, 128, %s16, [#allocation3]
    $region5: #{tpu_custom_call.1} parent=1 // pred_fallthru
      _
    // Predicated region
    $region6: #{tpu_custom_call.1} parent=1 // pred_check
      _
    $region7: #{tpu_custom_call.1} parent=1 // pred_check_branch
      %20 = sbr.rel (0) target = $region9
    $region8: #{tpu_custom_call.1} parent=1 // pred_region
      %22 = dma.done [#allocation3], 128
    $region9: #{tpu_custom_call.1} parent=1 // pred_fallthru
      _
    %v23 = vld [vmem:[#allocation2] sm:$0xff]
    %vm24 = vcmask 105472
    %25 = vst.msk [vmem:[#allocation5] sm:$0xff] %vm24, %v23
    // Predicated region
    $region10: #{tpu_custom_call.1} parent=1 // pred_check
      _
    $region11: #{tpu_custom_call.1} parent=1 // pred_check_branch
      %27 = sbr.rel (0) target = $region13
    $region12: #{tpu_custom_call.1} parent=1 // pred_region
      %29 = vsyncadd [#allocation4], 0
      %s31 = sshll.u32 [#allocation5], 4
      %s32 = int_to_ptr.vmem [resolvable:$true] %s31
      %s33 = sshll.u32 %s1, 4
      %s34 = int_to_ptr.hbm [resolvable:$true] %s33
      %36 = dma.vmem_to_hbm [thread:$0]  %s32, 128, %s34, [#allocation4]
    $region13: #{tpu_custom_call.1} parent=1 // pred_fallthru
      _
    // Predicated region
    $region14: #{tpu_custom_call.1} parent=1 // pred_check
      _
    $region15: #{tpu_custom_call.1} parent=1 // pred_check_branch
      %38 = sbr.rel (0) target = $region17
    $region16: #{tpu_custom_call.1} parent=1 // pred_region
      %40 = dma.done [#allocation4], 128
    $region17: #{tpu_custom_call.1} parent=1 // pred_fallthru
      _
    %41 = vsyncpa [#allocation3], 1
    %42 = vsyncpa [#allocation4], 1

</llo_original>
